<compile_context>
chip_gen: v7x
topology: tpu7x:2x2x1
jax: 0.10.0
libtpu: 0.0.40
codegen_flags: <defaults>
</compile_context>

<pallas_src>
import functools

import jax
import jax.numpy as jnp
from jax import lax
from jax.experimental import pallas as pl
from jax.experimental.pallas import tpu as pltpu


def _round_up(x, m):
    return ((x + m - 1) // m) * m


def _choose_row_layout(n, hw, sublane):
    """Pick (S, L) with S*L == n*hw, L a multiple of 128 dividing hw (so the NCHW channel
    is constant within each (view-row, s) sub-row).  Maximize sublane density, then L
    (bigger L -> smaller padded scale/bias blocks).  Fallback: (n, hw)."""
    best = None
    for l in range(128, hw + 1, 128):
        if hw % l:
            continue
        s = (n * hw) // l
        key = (s / _round_up(s, sublane), l)
        if best is None or key > best[0]:
            best = (key, (s, l))
    if best is None:
        return n, hw   # hw has no multiple-of-128 divisor: masked lane stores, still correct
    return best[1]


def _batch_statistics_kernel(x_ref, scale_ref, bias_ref, y_ref, loss_ref, *,
                             c_total, ct, tiles_per_core, inv_denom):
    p = pl.program_id(0)          # TensorCore-split axis ("parallel")
    j = pl.program_id(1)          # c-tile axis within a core ("arbitrary", loss-carried)
    g = p * tiles_per_core + j    # un-clamped logical c-tile index (used for masking only)

    # ---- affine in the native dtype; lane-dense (CT, S, L) store ----
    x = x_ref[...]                                    # (CT, S, L)
    y_ref[...] = x * scale_ref[...] + bias_ref[...]   # (CT, S, 1) broadcasts over lanes

    # ---- per-view-row statistics, accumulated in f32 ----
    xf = x.astype(jnp.float32)
    s1 = jnp.sum(xf, axis=2)                          # (CT, S)  lane reduction
    s2 = jnp.sum(xf * xf, axis=2)                     # (CT, S)
    g1 = jnp.sum(s1, axis=1, keepdims=True)           # (CT, 1)  per view-row sum
    g2 = jnp.sum(s2, axis=1, keepdims=True)           # (CT, 1)

    mean = g1 * inv_denom
    var = g2 * inv_denom - mean * mean
    # Faithful to the PyTorch module: var<=0 from fp cancellation -> NaN/-inf, as reference.
    lstd = 0.5 * jnp.log(var)                         # == log(sqrt(var))
    per_row = mean * mean + lstd * lstd               # (CT, 1)

    # Mask rows past C: covers the last partial tile AND the clamped duplicate step when
    # the per-core tile count does not divide the number of c-tiles evenly.
    row_ids = g * ct + lax.broadcasted_iota(jnp.int32, (ct, 1), 0)
    per_row = jnp.where(row_ids < c_total, per_row, 0.0)
    partial = jnp.sum(per_row, axis=0, keepdims=True)  # (1, 1)

    @pl.when(j == 0)
    def _():
        loss_ref[0] = jnp.zeros((1, 1), jnp.float32)

    loss_ref[0] += partial   # per-core carried partial; normalized by 1/C in the wrapper


def batch_statistics_forward(x, scale, bias):
    """x: (N, C, H, W). Returns (y, loss) like BatchStatistics(affine=C).forward."""
    N, C, H, W = x.shape
    HW = H * W
    isz = jnp.dtype(x.dtype).itemsize
    sublane = {4: 8, 2: 16, 1: 32}.get(isz, 8)

    # Free reshape of the contiguous NCHW tensor: row i of x3 is exactly row i of
    # input.view(C, N*H*W), laid out as (S, L) sub-rows.
    S, L = _choose_row_layout(N, HW, sublane)
    x3 = x.reshape(C, S, L)

    # NCHW channel of element (i, s, :) is (i*N + s // (HW//L)) % C  (L divides HW).
    k = HW // L
    ch = (jnp.arange(C)[:, None] * N + jnp.arange(S)[None, :] // k) % C      # (C, S)
    scale_rows = scale.astype(x.dtype)[ch][:, :, None]                        # (C, S, 1)
    bias_rows = bias.astype(x.dtype)[ch][:, :, None]                          # (C, S, 1)
    # NOTE: for sub-f32 inputs the affine runs in x.dtype (reference promotes to f32).

    # ---- generation-aware VMEM budget & tile size ----
    vmem_cap = 64 * 1024 * 1024            # conservative default (v7x per-core VMEM)
    try:
        info = pltpu.get_tpu_info()
        for name in ("vmem_capacity_bytes", "vmem_size_bytes", "vmem_bytes"):
            v = getattr(info, name, None)
            if v:
                vmem_cap = int(v)
                break
    except Exception:
        pass
    vmem_limit = min((vmem_cap * 7) // 8, 128 * 1024 * 1024)   # explicit scoped limit
    budget = (vmem_limit * 4) // 5                             # ~70-80% of the limit

    s_pad, l_pad = _round_up(S, sublane), _round_up(L, 128)
    per_c_row = (2 * 2 * s_pad * l_pad * isz      # x + y blocks, double-buffered
                 + 2 * 2 * s_pad * 128 * isz      # scale + bias blocks, double-buffered
                 + 2 * s_pad * l_pad * 4)         # f32 reduction temporaries
    CT = int(max(1, min(C, budget // per_c_row)))
    grid_c = (C + CT - 1) // CT

    # v7x has 2 TensorCores; on v5e/v6e this is just a harmless serial split of the loop.
    num_cores = 2 if grid_c >= 2 else 1
    tiles_per_core = (grid_c + num_cores - 1) // num_cores

    def tile_map(p, j):
        # Clamp the (at most one) overhang step of the last core back onto its own last
        # real tile: it re-writes identical y values and its loss contribution is masked.
        g = jnp.minimum(p * tiles_per_core + j, grid_c - 1)
        return (g, 0, 0)

    kernel = functools.partial(
        _batch_statistics_kernel,
        c_total=C, ct=CT, tiles_per_core=tiles_per_core,
        inv_denom=float(1.0 / (N * HW)),
    )

    y3, loss_parts = pl.pallas_call(
        kernel,
        grid=(num_cores, tiles_per_core),
        out_shape=(
            jax.ShapeDtypeStruct((C, S, L), x.dtype),
            jax.ShapeDtypeStruct((num_cores, 1, 1), jnp.float32),
        ),
        in_specs=[
            pl.BlockSpec((CT, S, L), tile_map),
            pl.BlockSpec((CT, S, 1), tile_map),
            pl.BlockSpec((CT, S, 1), tile_map),
        ],
        out_specs=(
            pl.BlockSpec((CT, S, L), tile_map),
            pl.BlockSpec((1, 1, 1), lambda p, j: (p, 0, 0)),   # per-core loss partial
        ),
        compiler_params=pltpu.CompilerParams(
            dimension_semantics=("parallel", "arbitrary"),
            vmem_limit_bytes=int(vmem_limit),
        ),
    )(x3, scale_rows, bias_rows)

    loss = jnp.sum(loss_parts) * (1.0 / C)
    return y3.reshape(N, C, H, W), loss


def _reference_forward(x, scale, bias):
    """Pure-JAX mirror of the PyTorch module for verification."""
    N, C, H, W = x.shape
    xf = x.reshape(C, -1).astype(jnp.float32)          # matches torch .view(C, -1)
    mean = xf.mean(axis=1)
    lstd = jnp.log(jnp.sqrt((xf ** 2).mean(axis=1) - mean ** 2))
    loss = jnp.mean(mean ** 2) + jnp.mean(lstd ** 2)
    y = x * scale[None, :, None, None] + bias[None, :, None, None]
    return y, loss


if __name__ == "__main__":
    key = jax.random.PRNGKey(0)
    N, C, H, W = 2, 4, 16, 16
    # nonzero mean / nonunit std so the loss is non-trivial
    x = jax.random.normal(key, (N, C, H, W), dtype=jnp.float32) * 1.3 + 0.5

    # Affine(C) parameters exactly as in __init__: scale = ones * scale_init, bias = zeros
    scale = jnp.ones((C,), dtype=jnp.float32)
    bias = jnp.zeros((C,), dtype=jnp.float32)

    y, loss = batch_statistics_forward(x, scale, bias)
    jax.block_until_ready((y, loss))

    y_ref, loss_ref = _reference_forward(x, scale, bias)
    assert jnp.allclose(y, y_ref, rtol=1e-5, atol=1e-5), "affine output mismatch"
    assert jnp.allclose(loss, loss_ref, rtol=1e-4, atol=1e-5), "loss mismatch"

    print("KERNEL_OK")
</pallas_src>

<mosaic_0001>
module attributes {stable_mosaic.version = 11 : i64} {
  func.func @_batch_statistics_kernel(%arg0: i32, %arg1: i32, %arg2: memref<4x4x128xf32, #tpu.memory_space<vmem>>, %arg3: memref<4x4x1xf32, #tpu.memory_space<vmem>>, %arg4: memref<4x4x1xf32, #tpu.memory_space<vmem>>, %arg5: memref<4x4x128xf32, #tpu.memory_space<vmem>>, %arg6: memref<1x1x1xf32, #tpu.memory_space<vmem>>) attributes {dimension_semantics = [#tpu.dimension_semantics<parallel>, #tpu.dimension_semantics<arbitrary>], iteration_bounds = array<i64: 1, 1>, scalar_prefetch = 0 : i64, scratch_operands = 0 : i64, tpu.core_type = #tpu.core_type<tc>, window_params = [{transform_indices = @transform_0, window_bounds = array<i64: 4, 4, 128>}, {transform_indices = @transform_1, window_bounds = array<i64: 4, 4, 1>}, {transform_indices = @transform_2, window_bounds = array<i64: 4, 4, 1>}, {transform_indices = @transform_3, window_bounds = array<i64: 4, 4, 128>}, {transform_indices = @transform_4, window_bounds = array<i64: 1, 1, 1>}]} {
    %c1_i32 = arith.constant 1 : i32
    %0 = arith.muli %arg0, %c1_i32 : i32
    %1 = arith.addi %0, %arg1 : i32
    %c0 = arith.constant 0 : index
    %c0_0 = arith.constant 0 : index
    %c0_1 = arith.constant 0 : index
    %2 = vector.load %arg2[%c0, %c0_0, %c0_1] : memref<4x4x128xf32, #tpu.memory_space<vmem>>, vector<4x4x128xf32>
    %c0_2 = arith.constant 0 : index
    %c0_3 = arith.constant 0 : index
    %c0_4 = arith.constant 0 : index
    %3 = vector.load %arg3[%c0_2, %c0_3, %c0_4] : memref<4x4x1xf32, #tpu.memory_space<vmem>>, vector<4x4x1xf32>
    %4 = vector.broadcast %3 : vector<4x4x1xf32> to vector<4x4x128xf32>
    %5 = arith.mulf %2, %4 : vector<4x4x128xf32>
    %c0_5 = arith.constant 0 : index
    %c0_6 = arith.constant 0 : index
    %c0_7 = arith.constant 0 : index
    %6 = vector.load %arg4[%c0_5, %c0_6, %c0_7] : memref<4x4x1xf32, #tpu.memory_space<vmem>>, vector<4x4x1xf32>
    %7 = vector.broadcast %6 : vector<4x4x1xf32> to vector<4x4x128xf32>
    %8 = arith.addf %5, %7 : vector<4x4x128xf32>
    %c0_8 = arith.constant 0 : index
    %c0_9 = arith.constant 0 : index
    %c0_10 = arith.constant 0 : index
    %9 = vector.load %arg5[%c0_8, %c0_9, %c0_10] : memref<4x4x128xf32, #tpu.memory_space<vmem>>, vector<4x4x128xf32>
    tpu.vector_store %arg5[%c0_8, %c0_9, %c0_10], %8 {strides = array<i32>} : memref<4x4x128xf32, #tpu.memory_space<vmem>>, vector<4x4x128xf32>,
    %cst = arith.constant dense<0.000000e+00> : vector<4x4xf32>
    %10 = vector.multi_reduction <add>, %2, %cst [2] : vector<4x4x128xf32> to vector<4x4xf32>
    %11 = arith.mulf %2, %2 : vector<4x4x128xf32>
    %cst_11 = arith.constant dense<0.000000e+00> : vector<4x4xf32>
    %12 = vector.multi_reduction <add>, %11, %cst_11 [2] : vector<4x4x128xf32> to vector<4x4xf32>
    %cst_12 = arith.constant dense<0.000000e+00> : vector<4xf32>
    %13 = vector.multi_reduction <add>, %10, %cst_12 [1] : vector<4x4xf32> to vector<4xf32>
    %14 = vector.shape_cast %13 : vector<4xf32> to vector<4x1xf32>
    %cst_13 = arith.constant dense<0.000000e+00> : vector<4xf32>
    %15 = vector.multi_reduction <add>, %12, %cst_13 [1] : vector<4x4xf32> to vector<4xf32>
    %16 = vector.shape_cast %15 : vector<4xf32> to vector<4x1xf32>
    %cst_14 = arith.constant 0.001953125 : f32
    %17 = vector.broadcast %cst_14 : f32 to vector<4x1xf32>
    %18 = arith.mulf %14, %17 : vector<4x1xf32>
    %cst_15 = arith.constant 0.001953125 : f32
    %19 = vector.broadcast %cst_15 : f32 to vector<4x1xf32>
    %20 = arith.mulf %16, %19 : vector<4x1xf32>
    %21 = arith.mulf %18, %18 : vector<4x1xf32>
    %22 = arith.subf %20, %21 : vector<4x1xf32>
    %23 = math.log %22 : vector<4x1xf32>
    %cst_16 = arith.constant 5.000000e-01 : f32
    %24 = vector.broadcast %cst_16 : f32 to vector<4x1xf32>
    %25 = arith.mulf %24, %23 : vector<4x1xf32>
    %26 = arith.mulf %18, %18 : vector<4x1xf32>
    %27 = arith.mulf %25, %25 : vector<4x1xf32>
    %28 = arith.addf %26, %27 : vector<4x1xf32>
    %c4_i32 = arith.constant 4 : i32
    %29 = arith.muli %1, %c4_i32 : i32
    %30 = tpu.iota {dimensions = array<i32: 0>} : vector<4x1xi32>
    %31 = vector.broadcast %29 : i32 to vector<4x1xi32>
    %32 = arith.addi %31, %30 : vector<4x1xi32>
    %c4_i32_17 = arith.constant 4 : i32
    %33 = vector.broadcast %c4_i32_17 : i32 to vector<4x1xi32>
    %34 = arith.cmpi slt, %32, %33 : vector<4x1xi32>
    %cst_18 = arith.constant 0.000000e+00 : f32
    %35 = vector.broadcast %cst_18 : f32 to vector<4x1xf32>
    %36 = arith.select %34, %28, %35 : vector<4x1xi1>, vector<4x1xf32>
    %cst_19 = arith.constant dense<0.000000e+00> : vector<1xf32>
    %37 = vector.multi_reduction <add>, %36, %cst_19 [0] : vector<4x1xf32> to vector<1xf32>
    %38 = vector.shape_cast %37 : vector<1xf32> to vector<1x1xf32>
    %c0_i32 = arith.constant 0 : i32
    %39 = arith.cmpi eq, %arg1, %c0_i32 : i32
    %40 = arith.extui %39 : i1 to i32
    %c0_i32_20 = arith.constant 0 : i32
    %41 = arith.cmpi ne, %40, %c0_i32_20 : i32
    scf.if %41 {
      %cst_27 = arith.constant 0.000000e+00 : f32
      %48 = vector.broadcast %cst_27 : f32 to vector<1x1xf32>
      %c0_28 = arith.constant 0 : index
      %c0_29 = arith.constant 0 : index
      %c0_30 = arith.constant 0 : index
      %49 = vector.load %arg6[%c0_28, %c0_29, %c0_30] : memref<1x1x1xf32, #tpu.memory_space<vmem>>, vector<1x1x1xf32>
      %50 = vector.shape_cast %49 : vector<1x1x1xf32> to vector<1x1xf32>
      %51 = vector.shape_cast %48 : vector<1x1xf32> to vector<1x1x1xf32>
      tpu.vector_store %arg6[%c0_28, %c0_29, %c0_30], %51 {strides = array<i32>} : memref<1x1x1xf32, #tpu.memory_space<vmem>>, vector<1x1x1xf32>,
    } else {
    }
    %c0_21 = arith.constant 0 : index
    %c0_22 = arith.constant 0 : index
    %c0_23 = arith.constant 0 : index
    %42 = vector.load %arg6[%c0_21, %c0_22, %c0_23] : memref<1x1x1xf32, #tpu.memory_space<vmem>>, vector<1x1x1xf32>
    %43 = vector.shape_cast %42 : vector<1x1x1xf32> to vector<1x1xf32>
    %44 = arith.addf %43, %38 : vector<1x1xf32>
    %c0_24 = arith.constant 0 : index
    %c0_25 = arith.constant 0 : index
    %c0_26 = arith.constant 0 : index
    %45 = vector.load %arg6[%c0_24, %c0_25, %c0_26] : memref<1x1x1xf32, #tpu.memory_space<vmem>>, vector<1x1x1xf32>
    %46 = vector.shape_cast %45 : vector<1x1x1xf32> to vector<1x1xf32>
    %47 = vector.shape_cast %44 : vector<1x1xf32> to vector<1x1x1xf32>
    tpu.vector_store %arg6[%c0_24, %c0_25, %c0_26], %47 {strides = array<i32>} : memref<1x1x1xf32, #tpu.memory_space<vmem>>, vector<1x1x1xf32>,
    return
  }
  func.func @transform_0(%arg0: i32, %arg1: i32) -> (i32, i32, i32) {
    %c1_i32 = arith.constant 1 : i32
    %0 = arith.muli %arg0, %c1_i32 : i32
    %1 = arith.addi %0, %arg1 : i32
    %c0_i32 = arith.constant 0 : i32
    %2 = arith.minsi %1, %c0_i32 : i32
    %c0_i32_0 = arith.constant 0 : i32
    %c0_i32_1 = arith.constant 0 : i32
    %c0_i32_2 = arith.constant 0 : i32
    return %2, %c0_i32_0, %c0_i32_1 : i32, i32, i32
  }
  func.func @transform_1(%arg0: i32, %arg1: i32) -> (i32, i32, i32) {
    %c1_i32 = arith.constant 1 : i32
    %0 = arith.muli %arg0, %c1_i32 : i32
    %1 = arith.addi %0, %arg1 : i32
    %c0_i32 = arith.constant 0 : i32
    %2 = arith.minsi %1, %c0_i32 : i32
    %c0_i32_0 = arith.constant 0 : i32
    %c0_i32_1 = arith.constant 0 : i32
    %c0_i32_2 = arith.constant 0 : i32
    return %2, %c0_i32_0, %c0_i32_1 : i32, i32, i32
  }
  func.func @transform_2(%arg0: i32, %arg1: i32) -> (i32, i32, i32) {
    %c1_i32 = arith.constant 1 : i32
    %0 = arith.muli %arg0, %c1_i32 : i32
    %1 = arith.addi %0, %arg1 : i32
    %c0_i32 = arith.constant 0 : i32
    %2 = arith.minsi %1, %c0_i32 : i32
    %c0_i32_0 = arith.constant 0 : i32
    %c0_i32_1 = arith.constant 0 : i32
    %c0_i32_2 = arith.constant 0 : i32
    return %2, %c0_i32_0, %c0_i32_1 : i32, i32, i32
  }
  func.func @transform_3(%arg0: i32, %arg1: i32) -> (i32, i32, i32) {
    %c1_i32 = arith.constant 1 : i32
    %0 = arith.muli %arg0, %c1_i32 : i32
    %1 = arith.addi %0, %arg1 : i32
    %c0_i32 = arith.constant 0 : i32
    %2 = arith.minsi %1, %c0_i32 : i32
    %c0_i32_0 = arith.constant 0 : i32
    %c0_i32_1 = arith.constant 0 : i32
    %c0_i32_2 = arith.constant 0 : i32
    return %2, %c0_i32_0, %c0_i32_1 : i32, i32, i32
  }
  func.func @transform_4(%arg0: i32, %arg1: i32) -> (i32, i32, i32) {
    %c0_i32 = arith.constant 0 : i32
    %c0_i32_0 = arith.constant 0 : i32
    %c0_i32_1 = arith.constant 0 : i32
    return %arg0, %c0_i32, %c0_i32_0 : i32, i32, i32
  }
}

</mosaic_0001>

<llo_original>
// kernel: tpu_custom_call.1
$region0: #{tpu_custom_call.1}
  #allocation0 [shape = 'u32[]', space=smem, size = 0x4, offset = 0x4, fixed_abs, tag = 'smem constant byte address 0x4 - core index']
  #allocation1 [shape = 'u32[144,128]{1,0:T(1,128)}', space=vmem, size = 0x12000, scoped, tag = 'internal scratch']
  %s0 = inlined_call_operand.vmem [shape: f32[4,4,128], index: 0, kind: input, shape index: {}]
  %s1 = inlined_call_operand.vmem [shape: f32[4,4,1], index: 1, kind: input, shape index: {}]
  %s2 = inlined_call_operand.vmem [shape: f32[4,4,1], index: 2, kind: input, shape index: {}]
  %s3 = inlined_call_operand.hbm [shape: f32[4,4,128], index: 3, kind: output, shape index: {0}]
  %s4 = inlined_call_operand.hbm [shape: f32[1,1,1], index: 4, kind: output, shape index: {1}]
  %5 = xla_tuple %s3, %s4
  %s6 = sld [smem:[#allocation0]]
  $region34: #{tpu_custom_call.1} parent=0
    _
  %s8 = ssub.s32 1, %s6
  %s9 = scalar_select 0, %s8, %s6
  $region1: #{tpu_custom_call.1} parent=0
    #allocation2 [shape = 'u8[8192]{0}', space=vmem, size = 0x2000, scoped, tag = 'output window, operand 0, single buffered']
    #allocation3 [shape = 's32[1]{0}', space=sflag, size = 0x4, scoped, tag = 'scoped memory for tpu_custom_call.1']
    #allocation4 [shape = 'u8[512]{0}', space=vmem, size = 0x400, scoped, tag = 'output window, operand 1, single buffered']
    #allocation5 [shape = 's32[1]{0}', space=sflag, size = 0x4, scoped, tag = 'scoped memory for tpu_custom_call.1']
    %10 = vsyncpa [#allocation3], 0
    %11 = vsyncpa [#allocation5], 0
    // Predicated region
    $region2: #{tpu_custom_call.1} parent=1 // pred_check
      _
    $region3: #{tpu_custom_call.1} parent=1 // pred_check_branch
      %13 = sbr.rel (0) target = $region5
    $region4: #{tpu_custom_call.1} parent=1 // pred_region
      %s14 = sadd.s32 0, 0
      %p15 = scmp.lt.s32.totalorder %s14, 0
      %s16 = scalar_select %p15, %s14, 0
      %s17 = smul.u32 4, %s16
      %p18 = scmp.lt.s32.totalorder %s17, 3
      %s19 = scalar_select %p18, %s17, 3
      %s20 = smul.addr %s19, 4
      %s21 = scalar_lea.vmem %s0, %s20
      %s22 = sadd.s32 0, 0
      %p23 = scmp.lt.s32.totalorder %s22, 0
      %s24 = scalar_select %p23, %s22, 0
      %s25 = smul.u32 4, %s24
    $region5: #{tpu_custom_call.1} parent=1 // pred_fallthru
      _
    // Predicated region
    $region6: #{tpu_custom_call.1} parent=1 // pred_check
      _
    $region7: #{tpu_custom_call.1} parent=1 // pred_check_branch
      %27 = sbr.rel (0) target = $region9
    $region8: #{tpu_custom_call.1} parent=1 // pred_region
      %s28 = sadd.s32 0, 0
      %p29 = scmp.lt.s32.totalorder %s28, 0
      %s30 = scalar_select %p29, %s28, 0
      %s31 = smul.u32 4, %s30
      %p32 = scmp.lt.s32.totalorder %s31, 3
      %s33 = scalar_select %p32, %s31, 3
      %s34 = smul.addr %s33, 4
      %s35 = scalar_lea.vmem %s1, %s34
      %s36 = sadd.s32 0, 0
      %p37 = scmp.lt.s32.totalorder %s36, 0
      %s38 = scalar_select %p37, %s36, 0
      %s39 = smul.u32 4, %s38
    $region9: #{tpu_custom_call.1} parent=1 // pred_fallthru
      _
    // Predicated region
    $region10: #{tpu_custom_call.1} parent=1 // pred_check
      _
    $region11: #{tpu_custom_call.1} parent=1 // pred_check_branch
      %41 = sbr.rel (0) target = $region13
    $region12: #{tpu_custom_call.1} parent=1 // pred_region
      %s42 = sadd.s32 0, 0
      %p43 = scmp.lt.s32.totalorder %s42, 0
      %s44 = scalar_select %p43, %s42, 0
      %s45 = smul.u32 4, %s44
      %p46 = scmp.lt.s32.totalorder %s45, 3
      %s47 = scalar_select %p46, %s45, 3
      %s48 = smul.addr %s47, 4
      %s49 = scalar_lea.vmem %s2, %s48
      %s50 = sadd.s32 0, 0
      %p51 = scmp.lt.s32.totalorder %s50, 0
      %s52 = scalar_select %p51, %s50, 0
      %s53 = smul.u32 4, %s52
    $region13: #{tpu_custom_call.1} parent=1 // pred_fallthru
      _
    %s54 = sadd.s32 0, 0
    %p55 = scmp.lt.s32.totalorder %s54, 0
    %s56 = scalar_select %p55, %s54, 0
    %s57 = smul.u32 4, %s56
    %p58 = scmp.lt.s32.totalorder %s57, 3
    %s59 = scalar_select %p58, %s57, 3
    %s60 = smul.addr %s59, 4
    %s61 = scalar_lea.vmem %s0, %s60
    %s62 = sadd.s32 0, 0
    %p63 = scmp.lt.s32.totalorder %s62, 0
    %s64 = scalar_select %p63, %s62, 0
    %s65 = smul.u32 4, %s64
    %p66 = scmp.lt.s32.totalorder %s65, 3
    %s67 = scalar_select %p66, %s65, 3
    %s68 = smul.addr %s67, 4
    %s69 = scalar_lea.vmem %s1, %s68
    %s70 = sadd.s32 0, 0
    %p71 = scmp.lt.s32.totalorder %s70, 0
    %s72 = scalar_select %p71, %s70, 0
    %s73 = smul.u32 4, %s72
    %p74 = scmp.lt.s32.totalorder %s73, 3
    %s75 = scalar_select %p74, %s73, 3
    %s76 = smul.addr %s75, 4
    %s77 = scalar_lea.vmem %s2, %s76
    %s78 = sadd.s32 0, 0
    %p79 = scmp.lt.s32.totalorder %s78, 0
    %s80 = scalar_select %p79, %s78, 0
    %s81 = smul.u32 4, %s80
    %p82 = scmp.lt.s32.totalorder %s81, 3
    %s83 = scalar_select %p82, %s81, 3
    %s84 = smul.addr %s83, 4
    %s85 = scalar_lea.vmem %s0, %s84
    %s86 = sadd.s32 0, 0
    %p87 = scmp.lt.s32.totalorder %s86, 0
    %s88 = scalar_select %p87, %s86, 0
    %s89 = smul.u32 4, %s88
    %s90 = sadd.s32 0, 0
    %p91 = scmp.lt.s32.totalorder %s90, 0
    %s92 = scalar_select %p91, %s90, 0
    %s93 = smul.u32 4, %s92
    %p94 = scmp.lt.s32.totalorder %s93, 3
    %s95 = scalar_select %p94, %s93, 3
    %s96 = smul.addr %s95, 4
    %s97 = scalar_lea.vmem %s1, %s96
    %s98 = sadd.s32 0, 0
    %p99 = scmp.lt.s32.totalorder %s98, 0
    %s100 = scalar_select %p99, %s98, 0
    %s101 = smul.u32 4, %s100
    %s102 = sadd.s32 0, 0
    %p103 = scmp.lt.s32.totalorder %s102, 0
    %s104 = scalar_select %p103, %s102, 0
    %s105 = smul.u32 4, %s104
    %p106 = scmp.lt.s32.totalorder %s105, 3
    %s107 = scalar_select %p106, %s105, 3
    %s108 = smul.addr %s107, 4
    %s109 = scalar_lea.vmem %s2, %s108
    %s110 = sadd.s32 0, 0
    %p111 = scmp.lt.s32.totalorder %s110, 0
    %s112 = scalar_select %p111, %s110, 0
    %s113 = smul.u32 4, %s112
    %s114 = sadd.s32 0, 0
    %p115 = scmp.lt.s32.totalorder %s114, 0
    %s116 = scalar_select %p115, %s114, 0
    %s117 = smul.u32 4, %s116
    %s118 = sadd.s32 0, 0
    %v119 = vld [vmem:[%s85] sm:$0xf]
    %v120 = vld [vmem:[%s85 + $0x4] sm:$0xf]
    %v121 = vld [vmem:[%s85 + $0x8] sm:$0xf]
    %v122 = vld [vmem:[%s85 + $0xc] sm:$0xf]
    %v123 = vld [vmem:[%s97] sm:$0xf]
    %v124 = vld [vmem:[%s97 + $0x4] sm:$0xf]
    %v125 = vld [vmem:[%s97 + $0x8] sm:$0xf]
    %v126 = vld [vmem:[%s97 + $0xc] sm:$0xf]
    %128 = vset.pattern.permute.xlu0 0
    %129 = vperm.xlu0 %128, %v123
    %v130 = vpop.permute.xlu0 %129
    %133 = vset.pattern.permute.xlu0 0
    %134 = vperm.xlu0 %133, %v124
    %v135 = vpop.permute.xlu0 %134
    %138 = vset.pattern.permute.xlu0 0
    %139 = vperm.xlu0 %138, %v125
    %v140 = vpop.permute.xlu0 %139
    %143 = vset.pattern.permute.xlu0 0
    %144 = vperm.xlu0 %143, %v126
    %v145 = vpop.permute.xlu0 %144
    %v147 = vmul.f32 %v119, %v130
    %v148 = vmul.f32 %v120, %v135
    %v149 = vmul.f32 %v121, %v140
    %v150 = vmul.f32 %v122, %v145
    %v151 = vld [vmem:[%s109] sm:$0xf]
    %v152 = vld [vmem:[%s109 + $0x4] sm:$0xf]
    %v153 = vld [vmem:[%s109 + $0x8] sm:$0xf]
    %v154 = vld [vmem:[%s109 + $0xc] sm:$0xf]
    %156 = vset.pattern.permute.xlu0 0
    %157 = vperm.xlu0 %156, %v151
    %v158 = vpop.permute.xlu0 %157
    %161 = vset.pattern.permute.xlu0 0
    %162 = vperm.xlu0 %161, %v152
    %v163 = vpop.permute.xlu0 %162
    %166 = vset.pattern.permute.xlu0 0
    %167 = vperm.xlu0 %166, %v153
    %v168 = vpop.permute.xlu0 %167
    %171 = vset.pattern.permute.xlu0 0
    %172 = vperm.xlu0 %171, %v154
    %v173 = vpop.permute.xlu0 %172
    %v175 = vadd.f32 %v147, %v158
    %v176 = vadd.f32 %v148, %v163
    %v177 = vadd.f32 %v149, %v168
    %v178 = vadd.f32 %v150, %v173
    %179 = vst [vmem:[#allocation2] sm:$0xf] %v175
    %180 = vst [vmem:[#allocation2 + $0x4] sm:$0xf] %v176
    %181 = vst [vmem:[#allocation2 + $0x8] sm:$0xf] %v177
    %182 = vst [vmem:[#allocation2 + $0xc] sm:$0xf] %v178
    %vm183 = vcmask 1043456
    %v184 = vsel %vm183, %v119, 0.0
    %185 = vadd.xlane.f32.xlu0 %v184
    %v186 = vpop.xlane.xlu0 %185
    %v187 = vsel %vm183, %v120, 0.0
    %188 = vadd.xlane.f32.xlu0 %v187
    %v189 = vpop.xlane.xlu0 %188
    %v190 = vsel %vm183, %v121, 0.0
    %191 = vadd.xlane.f32.xlu0 %v190
    %v192 = vpop.xlane.xlu0 %191
    %v193 = vsel %vm183, %v122, 0.0
    %194 = vadd.xlane.f32.xlu0 %v193
    %v195 = vpop.xlane.xlu0 %194
    %v196 = vmul.f32 %v119, %v119
    %v197 = vmul.f32 %v120, %v120
    %v198 = vmul.f32 %v121, %v121
    %v199 = vmul.f32 %v122, %v122
    %v200 = vsel %vm183, %v196, 0.0
    %201 = vadd.xlane.f32.xlu0 %v200
    %v202 = vpop.xlane.xlu0 %201
    %v203 = vsel %vm183, %v197, 0.0
    %204 = vadd.xlane.f32.xlu0 %v203
    %v205 = vpop.xlane.xlu0 %204
    %v206 = vsel %vm183, %v198, 0.0
    %207 = vadd.xlane.f32.xlu0 %v206
    %v208 = vpop.xlane.xlu0 %207
    %v209 = vsel %vm183, %v199, 0.0
    %210 = vadd.xlane.f32.xlu0 %v209
    %v211 = vpop.xlane.xlu0 %210
    %v216 = vlaneseq
    %v217 = vand.u32 %v216, 127
    %v218 = vlaneseq
    %v219 = vshrl.u32 %v218, 7
    %v220 = vsub.s32 %v217, %v219
    %v221 = vrot.slane %v186, %v220
    %v222 = vlaneseq
    %v223 = vshrl.u32 %v222, 7
    %v224 = vsub.s32 %v217, %v223
    %v225 = vrot.slane %v189, %v224
    %v226 = vlaneseq
    %v227 = vshrl.u32 %v226, 7
    %v228 = vsub.s32 %v217, %v227
    %v229 = vrot.slane %v192, %v228
    %v230 = vlaneseq
    %v231 = vshrl.u32 %v230, 7
    %v232 = vsub.s32 %v217, %v231
    %v233 = vrot.slane %v195, %v232
    %vm234 = vcmask 1041409
    %v235 = vsel %vm234, %v225, %v221
    %vm236 = vcmask 1042434
    %v237 = vsel %vm236, %v229, %v235
    %vm238 = vcmask 1043459
    %v239 = vsel %vm238, %v233, %v237
    %vm241 = vcmask 27648
    %v242 = vsel %vm241, %v239, 0.0
    %243 = vadd.xlane.f32.xlu0 %v242
    %v244 = vpop.xlane.xlu0 %243
    %v249 = vlaneseq
    %v250 = vshrl.u32 %v249, 7
    %v251 = vsub.s32 %v217, %v250
    %v252 = vrot.slane %v202, %v251
    %v253 = vlaneseq
    %v254 = vshrl.u32 %v253, 7
    %v255 = vsub.s32 %v217, %v254
    %v256 = vrot.slane %v205, %v255
    %v257 = vlaneseq
    %v258 = vshrl.u32 %v257, 7
    %v259 = vsub.s32 %v217, %v258
    %v260 = vrot.slane %v208, %v259
    %v261 = vlaneseq
    %v262 = vshrl.u32 %v261, 7
    %v263 = vsub.s32 %v217, %v262
    %v264 = vrot.slane %v211, %v263
    %v265 = vsel %vm234, %v256, %v252
    %v266 = vsel %vm236, %v260, %v265
    %v267 = vsel %vm238, %v264, %v266
    %v269 = vsel %vm241, %v267, 0.0
    %270 = vadd.xlane.f32.xlu0 %v269
    %v271 = vpop.xlane.xlu0 %270
    %v272 = vmul.f32 %v244, 0.001953125
    %v273 = vmul.f32 %v271, 0.001953125
    %v274 = vmul.f32 %v272, %v272
    %v275 = vsub.f32 %v273, %v274
    %v276 = vlog2.pop %v275
    %v277 = vmul.f32 %v276, 0.6931472
    %v278 = vmul.f32 %v277, 0.5
    %v279 = vmul.f32 %v278, %v278
    %v280 = vadd.f32 %v274, %v279
    %s281 = smul.u32 %s118, 4
    %v282 = vlaneseq
    %v283 = vshrl.u32 %v282, 7
    %v284 = vstv %s281
    %v285 = vadd.s32 %v284, %v283
    %vm286 = vcmp.lt.s32.totalorder %v285, 4
    %v287 = vsel %vm286, %v280, 0.0
    %v288 = vsel %vm183, %v287, 0.0
    %v289 = vrot.slane %v288, 4
    %v290 = vadd.f32 %v288, %v289
    %v291 = vrot.slane %v290, 2
    %v292 = vadd.f32 %v290, %v291
    %v293 = vrot.slane %v292, 1
    %v294 = vadd.f32 %v292, %v293
    %p295 = scmp.eq.s32.totalorder 0, 0
    // Predicated region
    $region14: #{tpu_custom_call.1} parent=1 // pred_check
      %p296 = pneg %p295
    $region15: #{tpu_custom_call.1} parent=1 // pred_check_branch
      %298 = sbr.rel (%p296) target = $region17
    $region16: #{tpu_custom_call.1} parent=1 // pred_region
      %vm299 = vcmask 0
      %300 = vst.msk [vmem:[#allocation4] sm:$0x1] %vm299, 0.0
    $region17: #{tpu_custom_call.1} parent=1 // pred_fallthru
      _
    %v301 = vld [vmem:[#allocation4] sm:$0x1]
    %v302 = vadd.f32 %v301, %v294
    %vm303 = vcmask 0
    %304 = vst.msk [vmem:[#allocation4] sm:$0x1] %vm303, %v302
    // Predicated region
    $region18: #{tpu_custom_call.1} parent=1 // pred_check
      _
    $region19: #{tpu_custom_call.1} parent=1 // pred_check_branch
      %306 = sbr.rel (0) target = $region21
    $region20: #{tpu_custom_call.1} parent=1 // pred_region
      %s307 = sadd.s32 0, 0
      %p308 = scmp.lt.s32.totalorder %s307, 0
      %s309 = scalar_select %p308, %s307, 0
      %s310 = smul.u32 4, %s309
      %s312 = ssub.s32 256, 256
      %313 = vsyncadd [#allocation3], %s312
      %s314 = smul.addr %s310, 64
      %s315 = scalar_lea.hbm %s3, %s314
      %s316 = sshll.u32 [#allocation2], 4
      %s317 = int_to_ptr.vmem [resolvable:$true] %s316
      %322 = dma.vmem_to_hbm [thread:$0]  %s317, 256, %s315, [#allocation3], 64, 64, 4
    $region21: #{tpu_custom_call.1} parent=1 // pred_fallthru
      _
    // Predicated region
    $region22: #{tpu_custom_call.1} parent=1 // pred_check
      _
    $region23: #{tpu_custom_call.1} parent=1 // pred_check_branch
      %324 = sbr.rel (0) target = $region25
    $region24: #{tpu_custom_call.1} parent=1 // pred_region
      %s326 = ssub.s32 16, 16
      %327 = vsyncadd [#allocation5], %s326
      %s329 = sshll.u32 [#allocation4], 4
      %s330 = int_to_ptr.vmem [resolvable:$true] %s329
      %332 = dma.vmem_to_hbm [thread:$0]  %s330, 16, %s4, [#allocation5]
    $region25: #{tpu_custom_call.1} parent=1 // pred_fallthru
      _
    // Predicated region
    $region26: #{tpu_custom_call.1} parent=1 // pred_check
      _
    $region27: #{tpu_custom_call.1} parent=1 // pred_check_branch
      %334 = sbr.rel (0) target = $region29
    $region28: #{tpu_custom_call.1} parent=1 // pred_region
      %335 = dma.done [#allocation3], 256
    $region29: #{tpu_custom_call.1} parent=1 // pred_fallthru
      _
    // Predicated region
    $region30: #{tpu_custom_call.1} parent=1 // pred_check
      _
    $region31: #{tpu_custom_call.1} parent=1 // pred_check_branch
      %337 = sbr.rel (0) target = $region33
    $region32: #{tpu_custom_call.1} parent=1 // pred_region
      %338 = dma.done [#allocation5], 16
    $region33: #{tpu_custom_call.1} parent=1 // pred_fallthru
      _
    %339 = vsyncpa [#allocation3], 1
    %340 = vsyncpa [#allocation5], 1

</llo_original>
